<compile_context>
chip_gen: v7x
topology: tpu7x:2x2x1
jax: 0.10.0
libtpu: 0.0.40
codegen_flags: <defaults>
</compile_context>

<pallas_src>
import jax
import jax.numpy as jnp
from jax.experimental import pallas as pl
from jax.experimental.pallas import tpu as pltpu


# Set to jnp.bfloat16 to halve HBM traffic on memory-bound layers (opt-in; validate
# tolerances before committing — (a-b)**2 loses precision when a ~= b).
STREAM_DTYPE = jnp.float32


# ----------------------------------------------------------------------------
# Generation-aware tiling / VMEM budgeting
# ----------------------------------------------------------------------------
def _tpu_vmem_bytes():
    try:
        return int(pltpu.get_tpu_info().vmem_capacity_bytes)
    except Exception:
        return 64 << 20  # conservative (v7x-sized) fallback


def _block_budget_bytes():
    """Per-block streaming budget: ~8 MiB on 128 MiB-VMEM parts, ~4 MiB on v7x."""
    return (8 << 20) if _tpu_vmem_bytes() >= (96 << 20) else (4 << 20)


def _pick_k_tile(hw, c, itemsize):
    """128-aligned spatial-contraction chunk; each (C, tk) block <= the budget."""
    budget_elems = max(_block_budget_bytes() // (itemsize * max(c, 1)), 128)
    for tk in (8192, 4096, 2048, 1024, 512, 256, 128):
        if tk <= budget_elems and hw % tk == 0:
            return tk
    return hw  # full-extent fallback (hw not 128-divisible); still a legal block


def _mosaic_params(block_bytes, scratch_bytes, semantics):
    """dimension_semantics + a vmem limit covering double-buffered inputs + scratch."""
    needed = 2 * int(sum(block_bytes)) + int(scratch_bytes) + (2 << 20)
    cap = max(_tpu_vmem_bytes() - (16 << 20), 32 << 20)
    limit = min(max(needed, 32 << 20), cap)
    return pltpu.CompilerParams(
        dimension_semantics=semantics, vmem_limit_bytes=int(limit)
    )


# ----------------------------------------------------------------------------
# Fused per-batch Gram-SSE (+ optional content-SSE) kernel
# ----------------------------------------------------------------------------
def _make_gram_kernel(inv_norm, with_content):
    """Grid: (B, nk).  Axis 0 ("parallel") is the batch; axis 1 ("arbitrary")
    walks spatial chunks and accumulates X @ X^T on the MXU into a (C, C) f32
    VMEM scratch.  The precomputed, normalized style Gram arrives as a resident
    (1, C, C) block; the epilogue forms the squared Gram difference and reduces
    it to a per-batch (1, 1, 1) partial sum — the Gram never touches HBM."""
    contract_spatial = (((1,), (1,)), ((), ()))  # X @ X^T: contract the lane dim

    if not with_content:

        def kernel(gt_ref, x_ref, so_ref, gx_acc):
            k = pl.program_id(1)

            @pl.when(k == 0)
            def _():
                gx_acc[...] = jnp.zeros_like(gx_acc)

            x = x_ref[0]  # (C, tk) in the streamed dtype; MXU accumulates in f32
            gx_acc[...] += jax.lax.dot_general(
                x, x, contract_spatial, preferred_element_type=jnp.float32
            )

            @pl.when(k == pl.num_programs(1) - 1)
            def _():
                d = gx_acc[...] * inv_norm - gt_ref[0]
                so_ref[0] = jnp.sum(d * d, keepdims=True)

        return kernel

    def kernel(gt_ref, x_ref, t_ref, so_ref, co_ref, gx_acc, ct_acc):
        k = pl.program_id(1)

        @pl.when(k == 0)
        def _():
            gx_acc[...] = jnp.zeros_like(gx_acc)
            ct_acc[...] = jnp.zeros_like(ct_acc)

        x = x_ref[0]  # (C, tk)
        t = t_ref[0]
        gx_acc[...] += jax.lax.dot_general(
            x, x, contract_spatial, preferred_element_type=jnp.float32
        )
        # Content SSE on the already-resident chunk: f32 VPU math, lane-dense
        # (1, tk) partial; the cross-lane reduce happens only in the epilogue.
        dct = x.astype(jnp.float32) - t.astype(jnp.float32)
        ct_acc[...] += jnp.sum(dct * dct, axis=0, keepdims=True)

        @pl.when(k == pl.num_programs(1) - 1)
        def _():
            d = gx_acc[...] * inv_norm - gt_ref[0]
            so_ref[0] = jnp.sum(d * d, keepdims=True)
            co_ref[0] = jnp.sum(ct_acc[...], keepdims=True)

    return kernel


def gram_style_loss(x, style_gram):
    """F.mse_loss(gram_matrix(x), style_gram) with style_gram precomputed/normalized."""
    B, C, H, W = x.shape
    HW = H * W
    xf = x.reshape(B, C, HW).astype(STREAM_DTYPE)
    gt = style_gram.astype(jnp.float32)
    tk = _pick_k_tile(HW, C, jnp.dtype(STREAM_DTYPE).itemsize)
    nk = HW // tk
    inv_norm = 1.0 / float(C * HW)

    partials = pl.pallas_call(
        _make_gram_kernel(inv_norm, with_content=False),
        out_shape=jax.ShapeDtypeStruct((B, 1, 1), jnp.float32),
        grid_spec=pltpu.PrefetchScalarGridSpec(
            num_scalar_prefetch=0,
            grid=(B, nk),
            in_specs=[
                pl.BlockSpec((1, C, C), lambda b, k: (b, 0, 0)),   # resident style Gram
                pl.BlockSpec((1, C, tk), lambda b, k: (b, 0, k)),  # streamed input chunks
            ],
            out_specs=pl.BlockSpec((1, 1, 1), lambda b, k: (b, 0, 0)),
            scratch_shapes=[pltpu.VMEM((C, C), jnp.float32)],
        ),
        compiler_params=_mosaic_params(
            [C * C * 4, C * tk * xf.dtype.itemsize],
            C * C * 4,
            ("parallel", "arbitrary"),
        ),
    )(gt, xf)
    return jnp.sum(partials) / float(B * C * C)


def gram_style_and_content_loss(x, t_content, style_gram):
    """Fused single-HBM-pass losses for the shared content/style layer.

    Returns (style_mse, content_mse):
      style_mse   = F.mse_loss(gram_matrix(x), style_gram)
      content_mse = F.mse_loss(x, t_content)
    """
    assert x.shape == t_content.shape and x.ndim == 4
    B, C, H, W = x.shape
    HW = H * W
    xf = x.reshape(B, C, HW).astype(STREAM_DTYPE)
    tf = t_content.reshape(B, C, HW).astype(STREAM_DTYPE)
    gt = style_gram.astype(jnp.float32)
    tk = _pick_k_tile(HW, C, jnp.dtype(STREAM_DTYPE).itemsize)
    nk = HW // tk
    inv_norm = 1.0 / float(C * HW)

    style_p, ct_p = pl.pallas_call(
        _make_gram_kernel(inv_norm, with_content=True),
        out_shape=(
            jax.ShapeDtypeStruct((B, 1, 1), jnp.float32),
            jax.ShapeDtypeStruct((B, 1, 1), jnp.float32),
        ),
        grid_spec=pltpu.PrefetchScalarGridSpec(
            num_scalar_prefetch=0,
            grid=(B, nk),
            in_specs=[
                pl.BlockSpec((1, C, C), lambda b, k: (b, 0, 0)),
                pl.BlockSpec((1, C, tk), lambda b, k: (b, 0, k)),
                pl.BlockSpec((1, C, tk), lambda b, k: (b, 0, k)),
            ],
            out_specs=[
                pl.BlockSpec((1, 1, 1), lambda b, k: (b, 0, 0)),
                pl.BlockSpec((1, 1, 1), lambda b, k: (b, 0, 0)),
            ],
            scratch_shapes=[
                pltpu.VMEM((C, C), jnp.float32),
                pltpu.VMEM((1, tk), jnp.float32),
            ],
        ),
        compiler_params=_mosaic_params(
            [C * C * 4, C * tk * xf.dtype.itemsize, C * tk * tf.dtype.itemsize],
            C * C * 4 + tk * 4,
            ("parallel", "arbitrary"),
        ),
    )(gt, xf, tf)
    style_loss = jnp.sum(style_p) / float(B * C * C)
    content_loss = jnp.sum(ct_p) / float(B * C * HW)
    return style_loss, content_loss


# ----------------------------------------------------------------------------
# ContStyleLoss port
# ----------------------------------------------------------------------------
def _normalized_gram(feat):
    """Normalized Gram (X @ X^T)/(C*H*W).  One-time __init__ cost (HIGHEST precision)."""
    b, c, h, w = feat.shape
    xf = feat.reshape(b, c, h * w).astype(jnp.float32)
    g = jnp.einsum("bcx,bdx->bcd", xf, xf, precision=jax.lax.Precision.HIGHEST)
    return g / float(c * h * w)


class ContStyleLoss:
    """JAX/Pallas port of the PyTorch ContStyleLoss forward pass.

    `vgg_apply(x)` plays the role of the hooked VGG: it returns the list of
    style-layer feature maps (NCHW) that the SetHook objects would capture.
    The style-image Gram matrices are precomputed once here (they are fixed),
    so each forward only computes the input-side Gram on the MXU.
    """

    def __init__(self, vgg_apply, style_im, ct_wgt, style_wgt, content_layer_id):
        self.vgg_apply = vgg_apply
        self.index = content_layer_id
        self.ct_wgt = ct_wgt
        self.style_wgt = style_wgt
        # Mirrors vgg(style_im) + [o.feats.data.clone() for o in self.sfs]
        self.style_feat = [jax.lax.stop_gradient(f) for f in vgg_apply(style_im)]
        # Precomputed, normalized style Grams (removed from the per-forward path).
        self.style_gram = [
            jax.lax.stop_gradient(_normalized_gram(f)) for f in self.style_feat
        ]

    def forward(self, input_img, target_img):
        # self.m(target_img.data); targ_feat = sfs[index].feats.data.clone()
        targ_feat = jax.lax.stop_gradient(
            self.vgg_apply(jax.lax.stop_gradient(target_img))[self.index]
        )
        # self.m(input_img); inp_feat = [o.feats for o in self.sfs]
        inp_feat = self.vgg_apply(input_img)

        result_st = [None] * len(inp_feat)
        # The content layer always indexes the style-layer list, so its content
        # SSE is fused into that layer's Gram pass (single HBM read of x and t).
        st_shared, ct = gram_style_and_content_loss(
            inp_feat[self.index], targ_feat, self.style_gram[self.index]
        )
        result_ct = [ct * self.ct_wgt]
        for i, (inp, gram) in enumerate(zip(inp_feat, self.style_gram)):
            if i == self.index:
                result_st[i] = st_shared * self.style_wgt
            else:
                result_st[i] = gram_style_loss(inp, gram) * self.style_wgt
        return result_ct, result_st


def make_standin_vgg(key):
    """Tiny deterministic stand-in for the hooked pretrained VGG feature trunk."""
    k0, k1 = jax.random.split(key)
    w0 = 0.1 * jax.random.normal(k0, (8, 3, 3, 3), jnp.float32)
    w1 = 0.1 * jax.random.normal(k1, (16, 8, 3, 3), jnp.float32)
    dn = ("NCHW", "OIHW", "NCHW")

    def apply(x):
        f0 = jax.nn.relu(
            jax.lax.conv_general_dilated(x, w0, (1, 1), "SAME", dimension_numbers=dn)
        )
        f1 = jax.nn.relu(
            jax.lax.conv_general_dilated(f0, w1, (2, 2), "SAME", dimension_numbers=dn)
        )
        return [f0, f1]  # "style layer" features; content layer id indexes this list

    return apply


if __name__ == "__main__":
    key = jax.random.PRNGKey(0)
    k_vgg, k_style, k_in, k_tg = jax.random.split(key, 4)

    N, C, res = 2, 3, 16
    vgg_apply = make_standin_vgg(k_vgg)
    style_im = jax.random.uniform(k_style, (N, C, res, res), dtype=jnp.float32)
    input_img = jax.random.uniform(k_in, (N, C, res, res), dtype=jnp.float32)
    target_img = jax.random.uniform(k_tg, (N, C, res, res), dtype=jnp.float32)

    ct_wgt, style_wgt = 1.0, 1.0e3
    loss_mod = ContStyleLoss(vgg_apply, style_im, ct_wgt, style_wgt, content_layer_id=1)

    result_ct, result_st = loss_mod.forward(input_img, target_img)
    (result_ct, result_st) = jax.block_until_ready((result_ct, result_st))

    # ---- plain-JAX reference check -------------------------------------------
    def gram_ref(g):
        b, c, h, w = g.shape
        gf = g.reshape(b, c, h * w)
        return (
            jnp.einsum("bcx,bdx->bcd", gf, gf, precision=jax.lax.Precision.HIGHEST)
            / (c * h * w)
        )

    inp_feats = vgg_apply(input_img)
    targ_feats = vgg_apply(target_img)
    ref_ct = jnp.mean((inp_feats[1] - targ_feats[1]) ** 2) * ct_wgt
    ref_st = [
        jnp.mean((gram_ref(i) - gram_ref(s)) ** 2) * style_wgt
        for i, s in zip(inp_feats, loss_mod.style_feat)
    ]

    assert jnp.allclose(result_ct[0], ref_ct, rtol=5e-4, atol=1e-6)
    for got, want in zip(result_st, ref_st):
        assert jnp.allclose(got, want, rtol=5e-4, atol=1e-6)

    print("KERNEL_OK")
</pallas_src>

<mosaic_0001>
module attributes {stable_mosaic.version = 11 : i64} {
  func.func @kernel(%arg0: i32, %arg1: i32, %arg2: memref<1x16x16xf32, #tpu.memory_space<vmem>>, %arg3: memref<1x16x64xf32, #tpu.memory_space<vmem>>, %arg4: memref<1x16x64xf32, #tpu.memory_space<vmem>>, %arg5: memref<1x1x1xf32, #tpu.memory_space<vmem>>, %arg6: memref<1x1x1xf32, #tpu.memory_space<vmem>>, %arg7: memref<16x16xf32, #tpu.memory_space<vmem>>, %arg8: memref<1x64xf32, #tpu.memory_space<vmem>>) attributes {dimension_semantics = [#tpu.dimension_semantics<parallel>, #tpu.dimension_semantics<arbitrary>], iteration_bounds = array<i64: 2, 1>, scalar_prefetch = 0 : i64, scratch_operands = 2 : i64, tpu.core_type = #tpu.core_type<tc>, window_params = [{transform_indices = @transform_0, window_bounds = array<i64: 1, 16, 16>}, {transform_indices = @transform_1, window_bounds = array<i64: 1, 16, 64>}, {transform_indices = @transform_2, window_bounds = array<i64: 1, 16, 64>}, {transform_indices = @transform_3, window_bounds = array<i64: 1, 1, 1>}, {transform_indices = @transform_4, window_bounds = array<i64: 1, 1, 1>}]} {
    %c0_i32 = arith.constant 0 : i32
    %0 = arith.cmpi eq, %arg1, %c0_i32 : i32
    %1 = arith.extui %0 : i1 to i32
    %c0_i32_0 = arith.constant 0 : i32
    %2 = arith.cmpi ne, %1, %c0_i32_0 : i32
    scf.if %2 {
      %cst_17 = arith.constant 0.000000e+00 : f32
      %21 = vector.broadcast %cst_17 : f32 to vector<16x16xf32>
      %c0_18 = arith.constant 0 : index
      %c0_19 = arith.constant 0 : index
      %22 = vector.load %arg7[%c0_18, %c0_19] : memref<16x16xf32, #tpu.memory_space<vmem>>, vector<16x16xf32>
      tpu.vector_store %arg7[%c0_18, %c0_19], %21 {strides = array<i32>} : memref<16x16xf32, #tpu.memory_space<vmem>>, vector<16x16xf32>,
      %cst_20 = arith.constant 0.000000e+00 : f32
      %23 = vector.broadcast %cst_20 : f32 to vector<1x64xf32>
      %c0_21 = arith.constant 0 : index
      %c0_22 = arith.constant 0 : index
      %24 = vector.load %arg8[%c0_21, %c0_22] : memref<1x64xf32, #tpu.memory_space<vmem>>, vector<1x64xf32>
      tpu.vector_store %arg8[%c0_21, %c0_22], %23 {strides = array<i32>} : memref<1x64xf32, #tpu.memory_space<vmem>>, vector<1x64xf32>,
    } else {
    }
    %c0 = arith.constant 0 : index
    %c0_1 = arith.constant 0 : index
    %c0_2 = arith.constant 0 : index
    %3 = vector.load %arg3[%c0, %c0_1, %c0_2] : memref<1x16x64xf32, #tpu.memory_space<vmem>>, vector<1x16x64xf32>
    %4 = vector.shape_cast %3 : vector<1x16x64xf32> to vector<16x64xf32>
    %c0_3 = arith.constant 0 : index
    %c0_4 = arith.constant 0 : index
    %c0_5 = arith.constant 0 : index
    %5 = vector.load %arg4[%c0_3, %c0_4, %c0_5] : memref<1x16x64xf32, #tpu.memory_space<vmem>>, vector<1x16x64xf32>
    %6 = vector.shape_cast %5 : vector<1x16x64xf32> to vector<16x64xf32>
    %c0_6 = arith.constant 0 : index
    %c0_7 = arith.constant 0 : index
    %7 = vector.load %arg7[%c0_6, %c0_7] : memref<16x16xf32, #tpu.memory_space<vmem>>, vector<16x16xf32>
    %cst = arith.constant dense<0.000000e+00> : vector<16x16xf32>
    %8 = tpu.matmul %4, %4, %cst {dimension_numbers = #tpu.dot_dimension_numbers<[1], [1], [0], [0], [0, 0, 1, 0], [], []>} : vector<16x64xf32>, vector<16x64xf32>, vector<16x16xf32> -> vector<16x16xf32>
    %9 = arith.addf %7, %8 : vector<16x16xf32>
    %c0_8 = arith.constant 0 : index
    %c0_9 = arith.constant 0 : index
    %10 = vector.load %arg7[%c0_8, %c0_9] : memref<16x16xf32, #tpu.memory_space<vmem>>, vector<16x16xf32>
    tpu.vector_store %arg7[%c0_8, %c0_9], %9 {strides = array<i32>} : memref<16x16xf32, #tpu.memory_space<vmem>>, vector<16x16xf32>,
    %11 = arith.subf %4, %6 : vector<16x64xf32>
    %c0_10 = arith.constant 0 : index
    %c0_11 = arith.constant 0 : index
    %12 = vector.load %arg8[%c0_10, %c0_11] : memref<1x64xf32, #tpu.memory_space<vmem>>, vector<1x64xf32>
    %13 = arith.mulf %11, %11 : vector<16x64xf32>
    %cst_12 = arith.constant dense<0.000000e+00> : vector<64xf32>
    %14 = vector.multi_reduction <add>, %13, %cst_12 [0] : vector<16x64xf32> to vector<64xf32>
    %15 = vector.shape_cast %14 : vector<64xf32> to vector<1x64xf32>
    %16 = arith.addf %12, %15 : vector<1x64xf32>
    %c0_13 = arith.constant 0 : index
    %c0_14 = arith.constant 0 : index
    %17 = vector.load %arg8[%c0_13, %c0_14] : memref<1x64xf32, #tpu.memory_space<vmem>>, vector<1x64xf32>
    tpu.vector_store %arg8[%c0_13, %c0_14], %16 {strides = array<i32>} : memref<1x64xf32, #tpu.memory_space<vmem>>, vector<1x64xf32>,
    %c0_i32_15 = arith.constant 0 : i32
    %18 = arith.cmpi eq, %arg1, %c0_i32_15 : i32
    %19 = arith.extui %18 : i1 to i32
    %c0_i32_16 = arith.constant 0 : i32
    %20 = arith.cmpi ne, %19, %c0_i32_16 : i32
    scf.if %20 {
      %c0_17 = arith.constant 0 : index
      %c0_18 = arith.constant 0 : index
      %21 = vector.load %arg7[%c0_17, %c0_18] : memref<16x16xf32, #tpu.memory_space<vmem>>, vector<16x16xf32>
      %cst_19 = arith.constant 9.765625E-4 : f32
      %22 = vector.broadcast %cst_19 : f32 to vector<16x16xf32>
      %23 = arith.mulf %21, %22 : vector<16x16xf32>
      %c0_20 = arith.constant 0 : index
      %c0_21 = arith.constant 0 : index
      %c0_22 = arith.constant 0 : index
      %24 = vector.load %arg2[%c0_20, %c0_21, %c0_22] : memref<1x16x16xf32, #tpu.memory_space<vmem>>, vector<1x16x16xf32>
      %25 = vector.shape_cast %24 : vector<1x16x16xf32> to vector<16x16xf32>
      %26 = arith.subf %23, %25 : vector<16x16xf32>
      %27 = arith.mulf %26, %26 : vector<16x16xf32>
      %28 = vector.shape_cast %27 : vector<16x16xf32> to vector<1x16x16xf32>
      %cst_23 = arith.constant dense<0.000000e+00> : vector<1xf32>
      %29 = vector.multi_reduction <add>, %28, %cst_23 [1, 2] : vector<1x16x16xf32> to vector<1xf32>
      %30 = vector.shape_cast %29 : vector<1xf32> to vector<1x1x1xf32>
      %31 = vector.extract %30[0, 0, 0] : f32 from vector<1x1x1xf32>
      %32 = vector.broadcast %31 : f32 to vector<1x1xf32>
      %c0_24 = arith.constant 0 : index
      %c0_25 = arith.constant 0 : index
      %c0_26 = arith.constant 0 : index
      %33 = vector.load %arg5[%c0_24, %c0_25, %c0_26] : memref<1x1x1xf32, #tpu.memory_space<vmem>>, vector<1x1x1xf32>
      %34 = vector.shape_cast %33 : vector<1x1x1xf32> to vector<1x1xf32>
      %35 = vector.shape_cast %32 : vector<1x1xf32> to vector<1x1x1xf32>
      tpu.vector_store %arg5[%c0_24, %c0_25, %c0_26], %35 {strides = array<i32>} : memref<1x1x1xf32, #tpu.memory_space<vmem>>, vector<1x1x1xf32>,
      %c0_27 = arith.constant 0 : index
      %c0_28 = arith.constant 0 : index
      %36 = vector.load %arg8[%c0_27, %c0_28] : memref<1x64xf32, #tpu.memory_space<vmem>>, vector<1x64xf32>
      %37 = vector.shape_cast %36 : vector<1x64xf32> to vector<1x1x64xf32>
      %cst_29 = arith.constant dense<0.000000e+00> : vector<1xf32>
      %38 = vector.multi_reduction <add>, %37, %cst_29 [1, 2] : vector<1x1x64xf32> to vector<1xf32>
      %39 = vector.shape_cast %38 : vector<1xf32> to vector<1x1x1xf32>
      %40 = vector.extract %39[0, 0, 0] : f32 from vector<1x1x1xf32>
      %41 = vector.broadcast %40 : f32 to vector<1x1xf32>
      %c0_30 = arith.constant 0 : index
      %c0_31 = arith.constant 0 : index
      %c0_32 = arith.constant 0 : index
      %42 = vector.load %arg6[%c0_30, %c0_31, %c0_32] : memref<1x1x1xf32, #tpu.memory_space<vmem>>, vector<1x1x1xf32>
      %43 = vector.shape_cast %42 : vector<1x1x1xf32> to vector<1x1xf32>
      %44 = vector.shape_cast %41 : vector<1x1xf32> to vector<1x1x1xf32>
      tpu.vector_store %arg6[%c0_30, %c0_31, %c0_32], %44 {strides = array<i32>} : memref<1x1x1xf32, #tpu.memory_space<vmem>>, vector<1x1x1xf32>,
    } else {
    }
    return
  }
  func.func @transform_0(%arg0: i32, %arg1: i32) -> (i32, i32, i32) {
    %c0_i32 = arith.constant 0 : i32
    %c0_i32_0 = arith.constant 0 : i32
    %c0_i32_1 = arith.constant 0 : i32
    return %arg0, %c0_i32, %c0_i32_0 : i32, i32, i32
  }
  func.func @transform_1(%arg0: i32, %arg1: i32) -> (i32, i32, i32) {
    %c0_i32 = arith.constant 0 : i32
    %c0_i32_0 = arith.constant 0 : i32
    return %arg0, %c0_i32, %arg1 : i32, i32, i32
  }
  func.func @transform_2(%arg0: i32, %arg1: i32) -> (i32, i32, i32) {
    %c0_i32 = arith.constant 0 : i32
    %c0_i32_0 = arith.constant 0 : i32
    return %arg0, %c0_i32, %arg1 : i32, i32, i32
  }
  func.func @transform_3(%arg0: i32, %arg1: i32) -> (i32, i32, i32) {
    %c0_i32 = arith.constant 0 : i32
    %c0_i32_0 = arith.constant 0 : i32
    %c0_i32_1 = arith.constant 0 : i32
    return %arg0, %c0_i32, %c0_i32_0 : i32, i32, i32
  }
  func.func @transform_4(%arg0: i32, %arg1: i32) -> (i32, i32, i32) {
    %c0_i32 = arith.constant 0 : i32
    %c0_i32_0 = arith.constant 0 : i32
    %c0_i32_1 = arith.constant 0 : i32
    return %arg0, %c0_i32, %c0_i32_0 : i32, i32, i32
  }
}

</mosaic_0001>

<llo_original>
// kernel: tpu_custom_call.1
$region0: #{tpu_custom_call.1}
  #allocation0 [shape = 'u32[]', space=smem, size = 0x4, offset = 0x4, fixed_abs, tag = 'smem constant byte address 0x4 - core index']
  #allocation1 [shape = 'u32[144,128]{1,0:T(1,128)}', space=vmem, size = 0x12000, scoped, tag = 'internal scratch']
  #allocation2 [shape = 'f32[16,16]{1,0:T(8,128)}', space=vmem, size = 0x2000, scoped, tag = 'scratch operand']
  #allocation3 [shape = 'f32[1,64]{1,0:T(1,128)}', space=vmem, size = 0x200, scoped, tag = 'scratch operand']
  %s0 = inlined_call_operand.hbm [shape: f32[2,16,16], index: 0, kind: input, shape index: {}]
  %s1 = inlined_call_operand.hbm [shape: f32[2,16,64], index: 1, kind: input, shape index: {}]
  %s2 = inlined_call_operand.hbm [shape: f32[2,16,64], index: 2, kind: input, shape index: {}]
  %s3 = inlined_call_operand.vmem [shape: f32[2,1,1], index: 3, kind: output, shape index: {0}]
  %s4 = inlined_call_operand.vmem [shape: f32[2,1,1], index: 4, kind: output, shape index: {1}]
  %5 = xla_tuple %s3, %s4
  %s6 = sld [smem:[#allocation0]]
  $region73: #{tpu_custom_call.1} parent=0
    _
  %s8 = ssub.s32 1, %s6
  %s9 = scalar_select 0, %s8, %s6
  $region1: #{tpu_custom_call.1} parent=0
    #allocation4 [shape = 'u8[16384]{0}', space=vmem, size = 0x4000, scoped, tag = 'input window, operand 0']
    #allocation5 [shape = 's32[2]{0}', space=sflag, size = 0x8, scoped, tag = 'scoped memory for tpu_custom_call.1']
    #allocation6 [shape = 'u8[16384]{0}', space=vmem, size = 0x4000, scoped, tag = 'input window, operand 1']
    #allocation7 [shape = 's32[2]{0}', space=sflag, size = 0x8, scoped, tag = 'scoped memory for tpu_custom_call.1']
    #allocation8 [shape = 'u8[16384]{0}', space=vmem, size = 0x4000, scoped, tag = 'input window, operand 2']
    %10 = vsyncpa [#allocation5], 0
    %s11 = scalar_lea.sflag [#allocation5], 1
    %12 = vsyncpa %s11, 0
    %13 = vsyncpa [#allocation7], 0
    %s14 = scalar_lea.sflag [#allocation7], 1
    %15 = vsyncpa %s14, 0
    loop: start=0, step=1, limit=4
    $region2: #{tpu_custom_call.1} parent=1 // loop_pre_header
      _
    $region3: #{tpu_custom_call.1} parent=1 // loop_header
      %s17 = sphi 0, %s21
      %p18 = scmp.ge.s32.totalorder %s17, 4
      %s24 = sphi 0, %s36
      %s25 = sphi 0, %s32
      %s26 = sphi 0, %s24
      %s27 = sphi 0, %s25
      %s28 = sphi 0, %s26
      %s29 = sphi 0, %s27
      %s39 = sphi 0, %s41
      %s42 = sphi 0, %s39
      %s43 = sphi 0, %s42
      %s59 = sphi 0, %s43
      %s67 = sphi 0, %s69
      %s70 = sphi 0, %s67
      %s71 = sphi 0, %s70
      %s87 = sphi 0, %s71
      %s95 = sphi 0, %s97
      %s98 = sphi 0, %s95
      %s99 = sphi 0, %s98
      %s115 = sphi 0, %s99
      %s121 = sphi 0, %s123
      %s124 = sphi 0, %s121
      %s125 = sphi 0, %s124
      %s141 = sphi 0, %s125
      %s147 = sphi 0, %s149
      %s150 = sphi 0, %s147
      %s151 = sphi 0, %s150
      %s167 = sphi 0, %s151
    $region4: #{tpu_custom_call.1} parent=1 // loop_header_branch
      %20 = sbr.rel (%p18) target = $region8
    $region5: #{tpu_custom_call.1} parent=1 // loop_body
      %s22 = ssub.s32 %s17, 1
      %s23 = ssub.s32 %s17, 2
      %s30 = sadd.s32 1, %s25
      %p31 = scmp.ge.s32.totalorder %s30, 1
      %s32 = scalar_select %p31, 0, %s30
      %s33 = sadd.s32 1, %s24
      %s34 = scalar_select %p31, %s33, %s24
      %p35 = scmp.ge.s32.totalorder %s34, 2
      %s36 = scalar_select %p35, 0, %s34
      %s37 = ssub.s32 %s24, %s36
      %p38 = scmp.eq.s32.totalorder %s37, 0
      %s40 = sadd.s32 %s39, 1
      %s41 = scalar_select %p38, %s39, %s40
      %p44 = pneg %p38
      %p45 = scmp.eq.s32.totalorder %s17, 1
      %p46 = por %p44, %p45
      %p47 = scmp.ne.s32.totalorder %s39, %s42
      %p48 = scmp.eq.s32.totalorder %s17, 0
      %p49 = por %p47, %p48
      %p50 = scmp.ne.s32.totalorder %s39, %s42
      %p51 = scmp.eq.s32.totalorder %s22, 1
      %p52 = por %p50, %p51
      %p53 = scmp.ne.s32.totalorder %s42, %s43
      %p54 = scmp.eq.s32.totalorder %s22, 0
      %p55 = por %p53, %p54
      %p56 = scmp.ne.s32.totalorder %s42, %s43
      %p57 = scmp.eq.s32.totalorder %s23, 1
      %p58 = por %p56, %p57
      %p60 = scmp.ne.s32.totalorder %s43, %s59
      %p61 = scmp.eq.s32.totalorder %s23, 0
      %p62 = por %p60, %p61
      %s63 = ssub.s32 %s24, %s36
      %s64 = ssub.s32 %s25, %s32
      %s65 = sor.u32 %s63, %s64
      %p66 = scmp.eq.s32.totalorder %s65, 0
      %s68 = sadd.s32 %s67, 1
      %s69 = scalar_select %p66, %s67, %s68
      %p72 = pneg %p66
      %p73 = scmp.eq.s32.totalorder %s17, 1
      %p74 = por %p72, %p73
      %p75 = scmp.ne.s32.totalorder %s67, %s70
      %p76 = scmp.eq.s32.totalorder %s17, 0
      %p77 = por %p75, %p76
      %p78 = scmp.ne.s32.totalorder %s67, %s70
      %p79 = scmp.eq.s32.totalorder %s22, 1
      %p80 = por %p78, %p79
      %p81 = scmp.ne.s32.totalorder %s70, %s71
      %p82 = scmp.eq.s32.totalorder %s22, 0
      %p83 = por %p81, %p82
      %p84 = scmp.ne.s32.totalorder %s70, %s71
      %p85 = scmp.eq.s32.totalorder %s23, 1
      %p86 = por %p84, %p85
      %p88 = scmp.ne.s32.totalorder %s71, %s87
      %p89 = scmp.eq.s32.totalorder %s23, 0
      %p90 = por %p88, %p89
      %s91 = ssub.s32 %s24, %s36
      %s92 = ssub.s32 %s25, %s32
      %s93 = sor.u32 %s91, %s92
      %p94 = scmp.eq.s32.totalorder %s93, 0
      %s96 = sadd.s32 %s95, 1
      %s97 = scalar_select %p94, %s95, %s96
      %p100 = pneg %p94
      %p101 = scmp.eq.s32.totalorder %s17, 1
      %p102 = por %p100, %p101
      %p103 = scmp.ne.s32.totalorder %s95, %s98
      %p104 = scmp.eq.s32.totalorder %s17, 0
      %p105 = por %p103, %p104
      %p106 = scmp.ne.s32.totalorder %s95, %s98
      %p107 = scmp.eq.s32.totalorder %s22, 1
      %p108 = por %p106, %p107
      %p109 = scmp.ne.s32.totalorder %s98, %s99
      %p110 = scmp.eq.s32.totalorder %s22, 0
      %p111 = por %p109, %p110
      %p112 = scmp.ne.s32.totalorder %s98, %s99
      %p113 = scmp.eq.s32.totalorder %s23, 1
      %p114 = por %p112, %p113
      %p116 = scmp.ne.s32.totalorder %s99, %s115
      %p117 = scmp.eq.s32.totalorder %s23, 0
      %p118 = por %p116, %p117
      %s119 = ssub.s32 %s24, %s36
      %p120 = scmp.eq.s32.totalorder %s119, 0
      %s122 = sadd.s32 %s121, 1
      %s123 = scalar_select %p120, %s121, %s122
      %p126 = pneg %p120
      %p127 = scmp.eq.s32.totalorder %s17, 1
      %p128 = por %p126, %p127
      %p129 = scmp.ne.s32.totalorder %s121, %s124
      %p130 = scmp.eq.s32.totalorder %s17, 0
      %p131 = por %p129, %p130
      %p132 = scmp.ne.s32.totalorder %s121, %s124
      %p133 = scmp.eq.s32.totalorder %s22, 1
      %p134 = por %p132, %p133
      %p135 = scmp.ne.s32.totalorder %s124, %s125
      %p136 = scmp.eq.s32.totalorder %s22, 0
      %p137 = por %p135, %p136
      %p138 = scmp.ne.s32.totalorder %s124, %s125
      %p139 = scmp.eq.s32.totalorder %s23, 1
      %p140 = por %p138, %p139
      %p142 = scmp.ne.s32.totalorder %s125, %s141
      %p143 = scmp.eq.s32.totalorder %s23, 0
      %p144 = por %p142, %p143
      %s145 = ssub.s32 %s24, %s36
      %p146 = scmp.eq.s32.totalorder %s145, 0
      %s148 = sadd.s32 %s147, 1
      %s149 = scalar_select %p146, %s147, %s148
      %p152 = pneg %p146
      %p153 = scmp.eq.s32.totalorder %s17, 1
      %p154 = por %p152, %p153
      %p155 = scmp.ne.s32.totalorder %s147, %s150
      %p156 = scmp.eq.s32.totalorder %s17, 0
      %p157 = por %p155, %p156
      %p158 = scmp.ne.s32.totalorder %s147, %s150
      %p159 = scmp.eq.s32.totalorder %s22, 1
      %p160 = por %p158, %p159
      %p161 = scmp.ne.s32.totalorder %s150, %s151
      %p162 = scmp.eq.s32.totalorder %s22, 0
      %p163 = por %p161, %p162
      %p164 = scmp.ne.s32.totalorder %s150, %s151
      %p165 = scmp.eq.s32.totalorder %s23, 1
      %p166 = por %p164, %p165
      %p168 = scmp.ne.s32.totalorder %s151, %s167
      %p169 = scmp.eq.s32.totalorder %s23, 0
      %p170 = por %p168, %p169
      %p171 = scmp.le.s32.totalorder 1, %s17
      %p172 = scmp.lt.s32.totalorder %s17, 3
      %p173 = pnand %p171, %p172
      %p174 = pneg %p173
      // Predicated region
      $region9: #{tpu_custom_call.1} parent=5 // pred_check
        _
      $region10: #{tpu_custom_call.1} parent=5 // pred_check_branch
        %176 = sbr.rel (%p173) target = $region12
      $region11: #{tpu_custom_call.1} parent=5 // pred_region
        %s177 = ssub.s32 %s17, 1
      $region12: #{tpu_custom_call.1} parent=5 // pred_fallthru
        _
      %p178 = scmp.lt.s32.totalorder %s17, 2
      // Predicated region
      $region13: #{tpu_custom_call.1} parent=5 // pred_check
        %p179 = pneg %p178
      $region14: #{tpu_custom_call.1} parent=5 // pred_check_branch
        %181 = sbr.rel (%p179) target = $region16
      $region15: #{tpu_custom_call.1} parent=5 // pred_region
        // Predicated region
        $region17: #{tpu_custom_call.1} parent=15 // pred_check
          %p182 = pneg %p49
        $region18: #{tpu_custom_call.1} parent=15 // pred_check_branch
          %184 = sbr.rel (%p182) target = $region20
        $region19: #{tpu_custom_call.1} parent=15 // pred_region
          %s185 = sand.u32 %s39, 1
          %s186 = scalar_lea.sflag [#allocation5], %s185
          %s187 = sand.u32 %s39, 1
          %s188 = smul.addr %s187, 16
          %s189 = scalar_lea.vmem [#allocation4], %s188
          %s191 = ssub.s32 256, 256
          %192 = vsyncadd %s186, %s191
          %s193 = smul.addr %s24, 2
          %s194 = smul.addr %s193, 128
          %s195 = scalar_lea.hbm %s0, %s194
          %s196 = sshll.u32 %s189, 4
          %s197 = int_to_ptr.vmem [resolvable:$true] %s196
          %202 = dma.hbm_to_vmem [thread:$0]  %s195, 256, %s197, %s186, 128, 128, 8
        $region20: #{tpu_custom_call.1} parent=15 // pred_fallthru
          _
        // Predicated region
        $region21: #{tpu_custom_call.1} parent=15 // pred_check
          %p203 = pneg %p77
        $region22: #{tpu_custom_call.1} parent=15 // pred_check_branch
          %205 = sbr.rel (%p203) target = $region24
        $region23: #{tpu_custom_call.1} parent=15 // pred_region
          %s206 = sand.u32 %s17, 1
          %s207 = scalar_lea.sflag [#allocation7], %s206
          %s208 = sand.u32 %s67, 1
          %s209 = smul.addr %s208, 16
          %s210 = scalar_lea.vmem [#allocation6], %s209
          %s212 = ssub.s32 256, 256
          %213 = vsyncadd %s207, %s212
          %s214 = smul.addr %s24, 2
          %s215 = sadd.s32 %s25, %s214
          %s216 = smul.addr %s215, 128
          %s217 = scalar_lea.hbm %s1, %s216
          %s218 = sshll.u32 %s210, 4
          %s219 = int_to_ptr.vmem [resolvable:$true] %s218
          %224 = dma.hbm_to_vmem [thread:$0]  %s217, 256, %s219, %s207, 128, 128, 8
        $region24: #{tpu_custom_call.1} parent=15 // pred_fallthru
          _
        // Predicated region
        $region25: #{tpu_custom_call.1} parent=15 // pred_check
          %p225 = pneg %p105
        $region26: #{tpu_custom_call.1} parent=15 // pred_check_branch
          %227 = sbr.rel (%p225) target = $region28
        $region27: #{tpu_custom_call.1} parent=15 // pred_region
          %s228 = sand.u32 %s17, 1
          %s229 = scalar_lea.sflag [#allocation7], %s228
          %s230 = sand.u32 %s95, 1
          %s231 = smul.addr %s230, 16
          %s232 = scalar_lea.vmem [#allocation8], %s231
          %s234 = ssub.s32 256, 256
          %235 = vsyncadd %s229, %s234
          %s236 = smul.addr %s24, 2
          %s237 = sadd.s32 %s25, %s236
          %s238 = smul.addr %s237, 128
          %s239 = scalar_lea.hbm %s2, %s238
          %s240 = sshll.u32 %s232, 4
          %s241 = int_to_ptr.vmem [resolvable:$true] %s240
          %246 = dma.hbm_to_vmem [thread:$0]  %s239, 256, %s241, %s229, 128, 128, 8
        $region28: #{tpu_custom_call.1} parent=15 // pred_fallthru
          _
      $region16: #{tpu_custom_call.1} parent=5 // pred_fallthru
        _
      %p247 = scmp.le.s32.totalorder 1, %s17
      %p248 = scmp.lt.s32.totalorder %s17, 3
      %p249 = pnand %p247, %p248
      %p250 = pneg %p249
      // Predicated region
      $region29: #{tpu_custom_call.1} parent=5 // pred_check
        _
      $region30: #{tpu_custom_call.1} parent=5 // pred_check_branch
        %252 = sbr.rel (%p249) target = $region32
      $region31: #{tpu_custom_call.1} parent=5 // pred_region
        %s253 = ssub.s32 %s17, 1
        %s254 = sand.u32 %s42, 1
        %s255 = scalar_lea.sflag [#allocation5], %s254
        %s256 = sand.u32 %s42, 1
        %s257 = smul.addr %s256, 16
        %s258 = scalar_lea.vmem [#allocation4], %s257
        // Predicated region
        $region33: #{tpu_custom_call.1} parent=31 // pred_check
          %p259 = pneg %p55
        $region34: #{tpu_custom_call.1} parent=31 // pred_check_branch
          %261 = sbr.rel (%p259) target = $region36
        $region35: #{tpu_custom_call.1} parent=31 // pred_region
          %262 = dma.done %s255, 256
        $region36: #{tpu_custom_call.1} parent=31 // pred_fallthru
          _
        %s263 = sand.u32 %s22, 1
        %s264 = scalar_lea.sflag [#allocation7], %s263
        %s265 = sand.u32 %s70, 1
        %s266 = smul.addr %s265, 16
        %s267 = scalar_lea.vmem [#allocation6], %s266
        // Predicated region
        $region37: #{tpu_custom_call.1} parent=31 // pred_check
          %p268 = pneg %p83
        $region38: #{tpu_custom_call.1} parent=31 // pred_check_branch
          %270 = sbr.rel (%p268) target = $region40
        $region39: #{tpu_custom_call.1} parent=31 // pred_region
          %271 = dma.done %s264, 256
        $region40: #{tpu_custom_call.1} parent=31 // pred_fallthru
          _
        %s272 = sand.u32 %s22, 1
        %s273 = scalar_lea.sflag [#allocation7], %s272
        %s274 = sand.u32 %s98, 1
        %s275 = smul.addr %s274, 16
        %s276 = scalar_lea.vmem [#allocation8], %s275
        // Predicated region
        $region41: #{tpu_custom_call.1} parent=31 // pred_check
          %p277 = pneg %p111
        $region42: #{tpu_custom_call.1} parent=31 // pred_check_branch
          %279 = sbr.rel (%p277) target = $region44
        $region43: #{tpu_custom_call.1} parent=31 // pred_region
          %280 = dma.done %s273, 256
        $region44: #{tpu_custom_call.1} parent=31 // pred_fallthru
          _
        %s281 = sand.u32 %s42, 1
        %s282 = scalar_lea.sflag [#allocation5], %s281
        %s283 = sand.u32 %s42, 1
        %s284 = smul.addr %s283, 16
        %s285 = scalar_lea.vmem [#allocation4], %s284
        %p286 = pneg %p55
        %p287 = pneg %p52
        %s288 = sand.u32 %s22, 1
        %s289 = scalar_lea.sflag [#allocation7], %s288
        %s290 = sand.u32 %s70, 1
        %s291 = smul.addr %s290, 16
        %s292 = scalar_lea.vmem [#allocation6], %s291
        %p293 = pneg %p83
        %p294 = pneg %p80
        %s295 = sand.u32 %s22, 1
        %s296 = scalar_lea.sflag [#allocation7], %s295
        %s297 = sand.u32 %s98, 1
        %s298 = smul.addr %s297, 16
        %s299 = scalar_lea.vmem [#allocation8], %s298
        %p300 = pneg %p111
        %p301 = pneg %p108
        %p302 = pneg %p137
        %p303 = pneg %p134
        %p304 = scmp.lt.s32.totalorder %s26, 1
        %s305 = scalar_select %p304, %s26, 1
        %s306 = scalar_lea.vmem %s3, %s305
        %p307 = pneg %p163
        %p308 = pneg %p160
        %p309 = scmp.lt.s32.totalorder %s26, 1
        %s310 = scalar_select %p309, %s26, 1
        %s311 = scalar_lea.vmem %s4, %s310
        %p312 = scmp.lt.s32.totalorder %s26, 1
        %s313 = scalar_select %p312, %s26, 1
        %s314 = scalar_lea.vmem %s3, %s313
        %p315 = scmp.lt.s32.totalorder %s26, 1
        %s316 = scalar_select %p315, %s26, 1
        %s317 = scalar_lea.vmem %s4, %s316
        %p318 = scmp.eq.s32.totalorder %s27, 0
        // Predicated region
        $region45: #{tpu_custom_call.1} parent=31 // pred_check
          %p319 = pneg %p318
        $region46: #{tpu_custom_call.1} parent=31 // pred_check_branch
          %321 = sbr.rel (%p319) target = $region48
        $region47: #{tpu_custom_call.1} parent=31 // pred_region
          %vm322 = vcmask 130048
          %323 = vst.msk [vmem:[#allocation2] sm:$0xff] %vm322, 0.0
          %324 = vst.msk [vmem:[#allocation2 + $0x8] sm:$0xff] %vm322, 0.0
          %vm325 = vcmask 516096
          %326 = vst.msk [vmem:[#allocation3] sm:$0x1] %vm325, 0.0
        $region48: #{tpu_custom_call.1} parent=31 // pred_fallthru
          _
        %v327 = vld [vmem:[%s267] sm:$0xff]
        %v328 = vld [vmem:[%s267 + $0x8] sm:$0xff]
        %v329 = vld [vmem:[%s276] sm:$0xff]
        %v330 = vld [vmem:[%s276 + $0x8] sm:$0xff]
        %v331 = vld [vmem:[#allocation2] sm:$0xff]
        %v332 = vld [vmem:[#allocation2 + $0x8] sm:$0xff]
        %vm333 = vcmask 523264
        %v335 = vsel %vm333, %v327, 0
        %v338 = vsel %vm333, %v328, 0
        %340 = vmatprep.subr.mxu0 0.0
        %341 = vmatpush1.xpose.msra.mxu0 %v335
        %342 = vmatprep.subr.mxu0 0.0
        %343 = vmatpush1.xpose.msra.mxu0 %v338
        %344 = vmatprep.subr.mxu0 0.0
        %345 = vmatpush1.xpose.msra.mxu0 0.0
        %346 = vmatprep.subr.mxu0 0.0
        %347 = vmatpush1.xpose.msra.mxu0 0.0
        %348 = vmatprep.subr.mxu0 0.0
        %349 = vmatpush1.xpose.msra.mxu0 0.0
        %350 = vmatprep.subr.mxu0 0.0
        %351 = vmatpush1.xpose.msra.mxu0 0.0
        %352 = vmatprep.subr.mxu0 0.0
        %353 = vmatpush1.xpose.msra.mxu0 0.0
        %354 = vmatprep.subr.mxu0 0.0
        %355 = vmatpush1.xpose.msra.mxu0 0.0
        %356 = vmatprep.subr.mxu0 0.0
        %357 = vmatpush1.xpose.msra.mxu0 0.0
        %358 = vmatprep.subr.mxu0 0.0
        %359 = vmatpush1.xpose.msra.mxu0 0.0
        %360 = vmatprep.subr.mxu0 0.0
        %361 = vmatpush1.xpose.msra.mxu0 0.0
        %362 = vmatprep.subr.mxu0 0.0
        %363 = vmatpush1.xpose.msra.mxu0 0.0
        %364 = vmatprep.subr.mxu0 0.0
        %365 = vmatpush1.xpose.msra.mxu0 0.0
        %366 = vmatprep.subr.mxu0 0.0
        %367 = vmatpush1.xpose.msra.mxu0 0.0
        %368 = vmatprep.subr.mxu0 0.0
        %369 = vmatpush1.xpose.msra.mxu0 0.0
        %370 = vmatprep.subr.mxu0 0.0
        %371 = vmatpush1.xpose.msra.mxu0 0.0
        %372 = vmatprep.subr.mxu0 0.0
        %373 = vmatpush1.xpose.msra.mxu0 0.0
        %374 = vmatprep.subr.mxu0 0.0
        %375 = vmatpush1.xpose.msra.mxu0 0.0
        %376 = vmatprep.subr.mxu0 0.0
        %377 = vmatpush1.xpose.msra.mxu0 0.0
        %378 = vmatprep.subr.mxu0 0.0
        %379 = vmatpush1.xpose.msra.mxu0 0.0
        %380 = vmatprep.subr.mxu0 0.0
        %381 = vmatpush1.xpose.msra.mxu0 0.0
        %382 = vmatprep.subr.mxu0 0.0
        %383 = vmatpush1.xpose.msra.mxu0 0.0
        %384 = vmatprep.subr.mxu0 0.0
        %385 = vmatpush1.xpose.msra.mxu0 0.0
        %386 = vmatprep.subr.mxu0 0.0
        %387 = vmatpush1.xpose.msra.mxu0 0.0
        %388 = vmatprep.subr.mxu0 0.0
        %389 = vmatpush1.xpose.msra.mxu0 0.0
        %390 = vmatprep.subr.mxu0 0.0
        %391 = vmatpush1.xpose.msra.mxu0 0.0
        %392 = vmatprep.subr.mxu0 0.0
        %393 = vmatpush1.xpose.msra.mxu0 0.0
        %394 = vmatprep.subr.mxu0 0.0
        %395 = vmatpush1.xpose.msra.mxu0 0.0
        %396 = vmatprep.subr.mxu0 0.0
        %397 = vmatpush1.xpose.msra.mxu0 0.0
        %398 = vmatprep.subr.mxu0 0.0
        %399 = vmatpush1.xpose.msra.mxu0 0.0
        %400 = vmatprep.subr.mxu0 0.0
        %401 = vmatpush1.xpose.msra.mxu0 0.0
        %402 = vmatprep.subr.mxu0 0.0
        %403 = vmatpush1.xpose.msra.mxu0 0.0
        %404 = vmatprep.mubr.f32.mxu0 0.0
        %405 = vmatmul.mubr.f32.gmra.mrb[0].mxu0 %v335
        %v406 = vpop.f32.mrb[0].mxu0
        %v407 = vadd.f32 0.0, %v406
        %v408 = vpop.f32.mrb[0].mxu0
        %409 = vmatprep.mubr.f32.mxu0 0.0
        %410 = vmatmul.mubr.f32.gmra.mrb[0].mxu0 %v338
        %v411 = vpop.f32.mrb[0].mxu0
        %v412 = vadd.f32 0.0, %v411
        %v413 = vpop.f32.mrb[0].mxu0
        %414 = vdwg.mxu0
        %v415 = vadd.f32 %v331, %v407
        %v416 = vadd.f32 %v332, %v412
        %vm417 = vcmask 130048
        %418 = vst.msk [vmem:[#allocation2] sm:$0xff] %vm417, %v415
        %419 = vst.msk [vmem:[#allocation2 + $0x8] sm:$0xff] %vm417, %v416
        %v420 = vsub.f32 %v327, %v329
        %v421 = vsub.f32 %v328, %v330
        %v422 = vld [vmem:[#allocation3] sm:$0x1]
        %v423 = vmul.f32 %v420, %v420
        %v424 = vmul.f32 %v421, %v421
        %v425 = vsel %vm333, %v423, 0.0
        %v426 = vsel %vm333, %v424, 0.0
        %v427 = vadd.f32 %v425, %v426
        %v428 = vrot.slane %v427, 4
        %v429 = vadd.f32 %v427, %v428
        %v430 = vrot.slane %v429, 2
        %v431 = vadd.f32 %v429, %v430
        %v432 = vrot.slane %v431, 1
        %v433 = vadd.f32 %v431, %v432
        %v434 = vadd.f32 %v422, %v433
        %vm435 = vcmask 516096
        %436 = vst.msk [vmem:[#allocation3] sm:$0x1] %vm435, %v434
        // Predicated region
        $region49: #{tpu_custom_call.1} parent=31 // pred_check
          %p437 = pneg %p318
        $region50: #{tpu_custom_call.1} parent=31 // pred_check_branch
          %439 = sbr.rel (%p437) target = $region52
        $region51: #{tpu_custom_call.1} parent=31 // pred_region
          %v440 = vld [vmem:[#allocation2] sm:$0xff]
          %v441 = vld [vmem:[#allocation2 + $0x8] sm:$0xff]
          %v442 = vmul.f32 %v440, 0.0009765625
          %v443 = vmul.f32 %v441, 0.0009765625
          %v444 = vld [vmem:[%s258] sm:$0xff]
          %v445 = vld [vmem:[%s258 + $0x8] sm:$0xff]
          %v446 = vsub.f32 %v442, %v444
          %v447 = vsub.f32 %v443, %v445
          %v448 = vmul.f32 %v446, %v446
          %v449 = vmul.f32 %v447, %v447
          %v450 = vsel %vm417, %v448, 0.0
          %v451 = vsel %vm417, %v449, 0.0
          %v452 = vadd.f32 %v450, %v451
          %453 = vadd.xlane.f32.xlu0 %v452
          %v454 = vpop.xlane.xlu0 %453
          %v455 = vrot.slane %v454, 4
          %v456 = vadd.f32 %v454, %v455
          %v457 = vrot.slane %v456, 2
          %v458 = vadd.f32 %v456, %v457
          %v459 = vrot.slane %v458, 1
          %v460 = vadd.f32 %v458, %v459
          %s461 = vtos %v460
          %v462 = vstv %s461
          %vm463 = vcmask 0
          %464 = vst.msk [vmem:[%s314] sm:$0x1] %vm463, %v462
          %v465 = vld [vmem:[#allocation3] sm:$0x1]
          %v466 = vsel %vm435, %v465, 0.0
          %467 = vadd.xlane.f32.xlu0 %v466
          %v468 = vpop.xlane.xlu0 %467
          %v469 = vrot.slane %v468, 4
          %v470 = vadd.f32 %v468, %v469
          %v471 = vrot.slane %v470, 2
          %v472 = vadd.f32 %v470, %v471
          %v473 = vrot.slane %v472, 1
          %v474 = vadd.f32 %v472, %v473
          %s475 = vtos %v474
          %v476 = vstv %s475
          %477 = vst.msk [vmem:[%s317] sm:$0x1] %vm463, %v476
        $region52: #{tpu_custom_call.1} parent=31 // pred_fallthru
          _
        %p478 = scmp.lt.s32.totalorder %s26, 1
        %s479 = scalar_select %p478, %s26, 1
        %s480 = scalar_lea.vmem %s3, %s479
        %p481 = scmp.lt.s32.totalorder %s26, 1
        %s482 = scalar_select %p481, %s26, 1
        %s483 = scalar_lea.vmem %s4, %s482
        // Predicated region
        $region53: #{tpu_custom_call.1} parent=31 // pred_check
          %p484 = pneg %p134
        $region54: #{tpu_custom_call.1} parent=31 // pred_check_branch
          %486 = sbr.rel (%p484) target = $region56
        $region55: #{tpu_custom_call.1} parent=31 // pred_region
          _
        $region56: #{tpu_custom_call.1} parent=31 // pred_fallthru
          _
        // Predicated region
        $region57: #{tpu_custom_call.1} parent=31 // pred_check
          %p487 = pneg %p160
        $region58: #{tpu_custom_call.1} parent=31 // pred_check_branch
          %489 = sbr.rel (%p487) target = $region60
        $region59: #{tpu_custom_call.1} parent=31 // pred_region
          _
        $region60: #{tpu_custom_call.1} parent=31 // pred_fallthru
          _
      $region32: #{tpu_custom_call.1} parent=5 // pred_fallthru
        _
      %p490 = scmp.le.s32.totalorder 2, %s17
      // Predicated region
      $region61: #{tpu_custom_call.1} parent=5 // pred_check
        %p491 = pneg %p490
      $region62: #{tpu_custom_call.1} parent=5 // pred_check_branch
        %493 = sbr.rel (%p491) target = $region64
      $region63: #{tpu_custom_call.1} parent=5 // pred_region
        %s494 = ssub.s32 %s17, 2
        // Predicated region
        $region65: #{tpu_custom_call.1} parent=63 // pred_check
          %p495 = pneg %p140
        $region66: #{tpu_custom_call.1} parent=63 // pred_check_branch
          %497 = sbr.rel (%p495) target = $region68
        $region67: #{tpu_custom_call.1} parent=63 // pred_region
          %p498 = scmp.lt.s32.totalorder %s28, 1
          %s499 = scalar_select %p498, %s28, 1
          %s500 = scalar_lea.vmem %s3, %s499
        $region68: #{tpu_custom_call.1} parent=63 // pred_fallthru
          _
        // Predicated region
        $region69: #{tpu_custom_call.1} parent=63 // pred_check
          %p501 = pneg %p166
        $region70: #{tpu_custom_call.1} parent=63 // pred_check_branch
          %503 = sbr.rel (%p501) target = $region72
        $region71: #{tpu_custom_call.1} parent=63 // pred_region
          %p504 = scmp.lt.s32.totalorder %s28, 1
          %s505 = scalar_select %p504, %s28, 1
          %s506 = scalar_lea.vmem %s4, %s505
        $region72: #{tpu_custom_call.1} parent=63 // pred_fallthru
          _
      $region64: #{tpu_custom_call.1} parent=5 // pred_fallthru
        _
    $region6: #{tpu_custom_call.1} parent=1 // loop_footer
      %s21 = sadd.s32 1, %s17
    $region7: #{tpu_custom_call.1} parent=1 // loop_footer_branch
      %16 = sbr.rel target = $region3
    $region8: #{tpu_custom_call.1} parent=1 // loop_exit
      _
    %507 = vsyncpa [#allocation5], 1
    %s508 = scalar_lea.sflag [#allocation5], 1
    %509 = vsyncpa %s508, 1
    %510 = vsyncpa [#allocation7], 1
    %s511 = scalar_lea.sflag [#allocation7], 1
    %512 = vsyncpa %s511, 1

</llo_original>
